<compile_context>
chip_gen: v5e
topology: v5e:2x2
jax: 0.10.0
libtpu: 0.0.40
codegen_flags: <defaults>
</compile_context>

<pallas_src>
import jax
import jax.numpy as jnp
from jax.experimental import pallas as pl
from jax.experimental.pallas import tpu as pltpu

# channels_first LayerNorm eps.
# TODO(synk): confirm eps against the repo's LayerNorm class (nn.LayerNorm default is
# 1e-5; ConvNeXt-style channels_first LayerNorm commonly uses 1e-6).
EPS = 1e-6

_LANE = 128


def _layernorm_cf(x_f32, w_ref, b_ref):
    """channels_first LayerNorm over the C (sublane) axis of a (C, tile_n) f32 tile.

    Single-traversal statistics (var = E[x^2] - mean^2).  Cancellation caveat: inputs to
    this head are O(1) activations, so the subtraction is well-conditioned; tiny negative
    rounding residue is clamped before the rsqrt."""
    mean = jnp.mean(x_f32, axis=0, keepdims=True)                       # (1, tile_n)
    var = jnp.mean(x_f32 * x_f32, axis=0, keepdims=True) - mean * mean
    var = jnp.maximum(var, 0.0)
    xn = (x_f32 - mean) * jax.lax.rsqrt(var + EPS)                      # rsqrt+mul, no divide
    return w_ref[...] * xn + b_ref[...]                                 # (C, 1) affine


def _make_kernel(tile_n, pad_cols, matmul_dtype, use_cache):
    def kernel(x_ref, w_ref, b_ref, g_ref, o_ref, cc_ref, attn_ref, *cache):
        # x_ref   : (1, C, tile_n) tile of the (B, C, n_pad) input
        # w_ref   : (C, 1) LN weight (VMEM f32)   b_ref: (C, 1) LN bias
        # g_ref   : (1,) gamma in SMEM
        # o_ref   : (1, C, tile_n) output tile
        # cc_ref  : (C, C) f32 scratch -- energy accumulator
        # attn_ref: (C, C) matmul_dtype scratch -- gamma * softmax, cast once at finalize
        # cache   : optional (C, n_pad) matmul_dtype scratch -- normalized xn cache
        p = pl.program_id(1)   # 0: accumulate energy, 1: apply attention
        n = pl.program_id(2)   # spatial tile index

        @pl.when(p == 0)
        def _accumulate_energy():
            xn = _layernorm_cf(x_ref[0].astype(jnp.float32), w_ref, b_ref)
            xn_mm = xn.astype(matmul_dtype)

            @pl.when(n == 0)
            def _init():
                if pad_cols:
                    # Padded spatial columns (zero input) normalize to exactly the LN
                    # bias b, so instead of masking every pass-0 tile we pre-subtract the
                    # rank-1 term pad_cols * outer(b, b) once.  b is routed through
                    # matmul_dtype so the correction matches what the MXU accumulates.
                    bb = b_ref[...].astype(matmul_dtype).astype(jnp.float32)   # (C, 1)
                    cc_ref[...] = (-float(pad_cols)) * jax.lax.dot_general(
                        bb, bb, (((1,), (1,)), ((), ())),
                        preferred_element_type=jnp.float32)
                else:
                    cc_ref[...] = jnp.zeros_like(cc_ref)

            if use_cache:
                start = pl.multiple_of(n * tile_n, _LANE)
                cache[0][:, pl.ds(start, tile_n)] = xn_mm

            # energy += xn @ xn.T without materializing the transpose: contract the lane
            # dim of both operands (trans_b MXU path), f32 accumulation.
            cc_ref[...] += jax.lax.dot_general(
                xn_mm, xn_mm, (((1,), (1,)), ((), ())),
                preferred_element_type=jnp.float32)

        @pl.when(p == 1)
        def _apply_attention():
            @pl.when(n == 0)
            def _finalize_attention():
                energy = cc_ref[...]
                # softmax(rowmax - energy) == softmax(-energy); the stable exponent is
                # rowmin(energy) - energy, so a single row reduction (min) suffices.
                e = jnp.exp(jnp.min(energy, axis=-1, keepdims=True) - energy)
                denom = jnp.sum(e, axis=-1, keepdims=True)              # (C, 1)
                # Fold gamma into the small (C, C) matrix and cast ONCE here (not once
                # per spatial tile).  The divide is over only C values -- negligible.
                attn_ref[...] = (e * (g_ref[0] / denom)).astype(attn_ref.dtype)

            if use_cache:
                start = pl.multiple_of(n * tile_n, _LANE)
                xn_mm = cache[0][:, pl.ds(start, tile_n)]
            else:
                # Streaming fallback: re-read x and recompute LN (exact, per-position).
                xn = _layernorm_cf(x_ref[0].astype(jnp.float32), w_ref, b_ref)
                xn_mm = xn.astype(matmul_dtype)

            out = jax.lax.dot_general(
                attn_ref[...], xn_mm, (((1,), (0,)), ((), ())),
                preferred_element_type=jnp.float32)                     # (C, tile_n)
            o_ref[0] = out.astype(o_ref.dtype)

    return kernel


def _vmem_capacity_bytes():
    try:
        return int(pltpu.get_tpu_info().vmem_capacity_bytes)
    except Exception:
        return 64 * 2**20   # conservative (v7x-sized) fallback if the query is unavailable


def _plan(n_lane, c, x_itemsize, mm_itemsize, tile_n, use_cache):
    """Generation-aware plan: (tile_n, n_pad, use_cache, vmem_limit).

    Budget derives from the detected chip's VMEM capacity (~48 MiB usable on v7x's
    64 MiB, ~96 MiB on v5e/v6e's 128 MiB), split between the double-buffered streaming
    tiles, in-kernel f32 temporaries, the (C, C) scratches and (optionally) the xn cache."""
    vmem_cap = _vmem_capacity_bytes()
    cap = min((vmem_cap * 3) // 4, vmem_cap - (8 << 20))

    def footprint(tile, cached):
        n_pad = pl.cdiv(n_lane, tile) * tile
        pipe = 4 * c * tile * x_itemsize            # 2x in + 2x out pipeline buffers
        temps = 6 * c * tile * 4                    # in-kernel f32 temporaries (estimate)
        scr = 2 * c * c * 4                         # energy + attention scratch
        cache_b = c * n_pad * mm_itemsize if cached else 0
        return pipe + temps + scr + cache_b + (2 << 20), n_pad

    auto_tile = tile_n is None
    if auto_tile:
        # Largest lane-dense tile within half the budget; do NOT force a divisor of
        # n_lane -- the wrapper pads N up to a multiple of the chosen tile instead.
        per_col = 4 * c * x_itemsize + 6 * c * 4
        tile_n = max(_LANE, ((cap // 2) // per_col) // _LANE * _LANE)
        tile_n = min(tile_n, n_lane)
    assert tile_n % _LANE == 0, tile_n

    cached = True if use_cache is None else bool(use_cache)
    total, n_pad = footprint(tile_n, cached)
    while total > cap and auto_tile and tile_n > _LANE:
        tile_n -= _LANE
        total, n_pad = footprint(tile_n, cached)
    if total > cap and cached and use_cache is None:
        cached = False                              # xn cache doesn't fit -> stream
        total, n_pad = footprint(tile_n, cached)
    vmem_limit = int(min(max(total, 8 << 20), cap))
    return tile_n, n_pad, cached, vmem_limit


def channel_attention(x, ln_weight, ln_bias, gamma, *, tile_n=None,
                      matmul_dtype=None, use_cache=None):
    """ChannelAttention forward.  x: (B, C, H, W); ln_weight/ln_bias: (C,); gamma scalar."""
    B, C, H, W = x.shape
    N = H * W
    n_lane = pl.cdiv(N, _LANE) * _LANE

    if matmul_dtype is None:
        # f32 operands are free where the MXU has slack (arithmetic intensity ~C flops
        # per byte) and the energy logits scale like O(H*W); bf16 only for large C.
        matmul_dtype = jnp.float32 if C < 256 else jnp.bfloat16
    matmul_dtype = jnp.dtype(matmul_dtype)

    tile_n, n_pad, use_cache, vmem_limit = _plan(
        n_lane, C, x.dtype.itemsize, matmul_dtype.itemsize, tile_n, use_cache)
    nt = n_pad // tile_n
    pad_cols = n_pad - N

    x_flat = x.reshape(B, C, N)
    if pad_cols:
        x_flat = jnp.pad(x_flat, ((0, 0), (0, 0), (0, pad_cols)))

    w2 = ln_weight.reshape(C, 1).astype(jnp.float32)
    b2 = ln_bias.reshape(C, 1).astype(jnp.float32)
    g1 = jnp.reshape(gamma, (1,)).astype(jnp.float32)

    kernel = _make_kernel(tile_n, pad_cols, matmul_dtype, use_cache)

    itemsize = x.dtype.itemsize
    x_reads = 1 if use_cache else 2   # cached path reads x from HBM exactly once
    cost = pl.CostEstimate(
        flops=4 * B * C * C * n_pad + 16 * B * C * n_pad,
        transcendentals=B * (C * C + n_pad),
        bytes_accessed=(x_reads + 1) * B * C * n_pad * itemsize + (2 * C + 1) * 4,
    )

    scratch_shapes = [pltpu.VMEM((C, C), jnp.float32),
                      pltpu.VMEM((C, C), matmul_dtype)]
    if use_cache:
        scratch_shapes.append(pltpu.VMEM((C, n_pad), matmul_dtype))

    if use_cache:
        # Pin the input block during pass 1 so already-cached tiles are not re-DMA'd
        # from HBM (one revisit DMA at the pass boundary, then constant).
        x_index_map = lambda b, p, n: (b, 0, n * (1 - p))
    else:
        x_index_map = lambda b, p, n: (b, 0, n)

    out_flat = pl.pallas_call(
        kernel,
        out_shape=jax.ShapeDtypeStruct((B, C, n_pad), x.dtype),
        grid_spec=pltpu.PrefetchScalarGridSpec(
            num_scalar_prefetch=0,
            # TODO(synk): v7x dual-TC utilization when B == 1 (split pass-0 tiles across
            # cores with per-core partial energies via core_map) is not implemented;
            # B is the only parallel axis here.
            grid=(B, 2, nt),   # (batch, pass, spatial tile); reduction axes innermost
            in_specs=[
                pl.BlockSpec((1, C, tile_n), x_index_map),
                pl.BlockSpec((C, 1), lambda b, p, n: (0, 0)),
                pl.BlockSpec((C, 1), lambda b, p, n: (0, 0)),
                pl.BlockSpec(memory_space=pltpu.MemorySpace.SMEM),   # gamma scalar
            ],
            # During pass 0 the out block index is pinned to (b, 0, 0): no writeback is
            # issued until pass 1 fills the tiles, so each output tile hits HBM once.
            out_specs=pl.BlockSpec((1, C, tile_n), lambda b, p, n: (b, 0, n * p)),
            scratch_shapes=scratch_shapes,
        ),
        compiler_params=pltpu.CompilerParams(
            dimension_semantics=("parallel", "arbitrary", "arbitrary"),
            vmem_limit_bytes=vmem_limit,
        ),
        cost_estimate=cost,
    )(x_flat, w2, b2, g1)

    out = out_flat[:, :, :N] if pad_cols else out_flat
    return out.reshape(B, C, H, W)


def _reference(x, ln_weight, ln_bias, gamma, matmul_dtype=jnp.float32):
    """Pure-JAX reference of the PyTorch forward.  Matmul operands are cast to
    `matmul_dtype` (with f32 accumulation) exactly like the kernel, isolating structural
    correctness from MXU operand-precision choices."""
    B, C, H, W = x.shape
    mean = jnp.mean(x, axis=1, keepdims=True)
    var = jnp.mean((x - mean) ** 2, axis=1, keepdims=True)
    xn = (x - mean) * jax.lax.rsqrt(var + EPS)
    xn = ln_weight[None, :, None, None] * xn + ln_bias[None, :, None, None]
    q = xn.reshape(B, C, H * W).astype(matmul_dtype)
    energy = jnp.einsum('bcn,bdn->bcd', q, q, preferred_element_type=jnp.float32)
    energy_new = jnp.max(energy, axis=-1, keepdims=True) - energy
    attn = jax.nn.softmax(energy_new, axis=-1)
    out = jnp.einsum('bcd,bdn->bcn', attn.astype(matmul_dtype), q,
                     preferred_element_type=jnp.float32)
    return (jnp.float32(gamma) * out).reshape(B, C, H, W)


if __name__ == "__main__":
    key = jax.random.PRNGKey(0)
    k1, k2, k3, k4, k5, k6 = jax.random.split(key, 6)

    # Case 1: lane-aligned spatial size (16x16 -> N=256), tile_n=128 so the C x C energy
    # is accumulated across multiple N-tiles and the xn cache is exercised.  gamma = 1.
    B, C, H, W = 2, 4, 16, 16
    x = jax.random.normal(k1, (B, C, H, W), dtype=jnp.float32)
    ln_w = jnp.ones((C,), jnp.float32) + 0.1 * jax.random.normal(k2, (C,), jnp.float32)
    ln_b = 0.1 * jax.random.normal(k3, (C,), jnp.float32)
    gamma = jnp.float32(1.0)

    out = jax.block_until_ready(channel_attention(x, ln_w, ln_b, gamma, tile_n=128))
    ref = _reference(x, ln_w, ln_b, gamma)
    assert out.shape == (B, C, H, W)
    assert jnp.allclose(out, ref, atol=1e-3, rtol=1e-3), float(jnp.max(jnp.abs(out - ref)))

    # Case 2: non-128-multiple spatial size (14x14 -> N=196; padded + rank-1 bias
    # correction), C=8, non-trivial gamma (exercises the gamma fold).
    B, C, H, W = 2, 8, 14, 14
    x = jax.random.normal(k4, (B, C, H, W), dtype=jnp.float32)
    ln_w = jnp.ones((C,), jnp.float32) + 0.1 * jax.random.normal(k5, (C,), jnp.float32)
    ln_b = 0.1 * jax.random.normal(k6, (C,), jnp.float32)
    gamma = jnp.float32(0.75)

    out = jax.block_until_ready(channel_attention(x, ln_w, ln_b, gamma, tile_n=128))
    ref = _reference(x, ln_w, ln_b, gamma)
    assert out.shape == (B, C, H, W)
    assert jnp.allclose(out, ref, atol=1e-3, rtol=1e-3), float(jnp.max(jnp.abs(out - ref)))

    # Case 3: streaming fallback (no xn cache) with auto tile selection + pad-up.
    out = jax.block_until_ready(channel_attention(x, ln_w, ln_b, gamma, use_cache=False))
    assert jnp.allclose(out, ref, atol=1e-3, rtol=1e-3), float(jnp.max(jnp.abs(out - ref)))

    # Case 4: bf16 matmul-operand path (looser tolerance; f32 accumulation in both).
    out = jax.block_until_ready(
        channel_attention(x, ln_w, ln_b, gamma, tile_n=128, matmul_dtype=jnp.bfloat16))
    ref_bf16 = _reference(x, ln_w, ln_b, gamma, matmul_dtype=jnp.bfloat16)
    assert jnp.allclose(out, ref_bf16, atol=2e-2, rtol=2e-2), \
        float(jnp.max(jnp.abs(out - ref_bf16)))

    print("KERNEL_OK")
</pallas_src>

<mosaic_0001>
module attributes {stable_mosaic.version = 11 : i64} {
  func.func @kernel(%arg0: i32, %arg1: i32, %arg2: i32, %arg3: memref<1x4x128xf32, #tpu.memory_space<vmem>>, %arg4: memref<4x1xf32, #tpu.memory_space<vmem>>, %arg5: memref<4x1xf32, #tpu.memory_space<vmem>>, %arg6: memref<1xf32, #tpu.memory_space<smem>>, %arg7: memref<1x4x128xf32, #tpu.memory_space<vmem>>, %arg8: memref<4x4xf32, #tpu.memory_space<vmem>>, %arg9: memref<4x4xf32, #tpu.memory_space<vmem>>, %arg10: memref<4x256xf32, #tpu.memory_space<vmem>>) attributes {dimension_semantics = [#tpu.dimension_semantics<parallel>, #tpu.dimension_semantics<arbitrary>, #tpu.dimension_semantics<arbitrary>], iteration_bounds = array<i64: 2, 2, 2>, scalar_prefetch = 0 : i64, scratch_operands = 3 : i64, tpu.core_type = #tpu.core_type<tc>, window_params = [{transform_indices = @transform_0, window_bounds = array<i64: 1, 4, 128>}, {pipeline_mode = #tpu.pipeline_mode<synchronous>, transform_indices = @transform_1, window_bounds = array<i64: 4, 1>}, {pipeline_mode = #tpu.pipeline_mode<synchronous>, transform_indices = @transform_2, window_bounds = array<i64: 4, 1>}, {transform_indices = @transform_3, window_bounds = array<i64: 1>}, {transform_indices = @transform_4, window_bounds = array<i64: 1, 4, 128>}]} {
    %c0_i32 = arith.constant 0 : i32
    %0 = arith.cmpi eq, %arg1, %c0_i32 : i32
    %1 = arith.extui %0 : i1 to i32
    %c0_i32_0 = arith.constant 0 : i32
    %2 = arith.cmpi ne, %1, %c0_i32_0 : i32
    scf.if %2 {
      %c0 = arith.constant 0 : index
      %c0_2 = arith.constant 0 : index
      %c0_3 = arith.constant 0 : index
      %6 = vector.load %arg3[%c0, %c0_2, %c0_3] : memref<1x4x128xf32, #tpu.memory_space<vmem>>, vector<1x4x128xf32>
      %7 = vector.shape_cast %6 : vector<1x4x128xf32> to vector<4x128xf32>
      %cst = arith.constant dense<0.000000e+00> : vector<128xf32>
      %8 = vector.multi_reduction <add>, %7, %cst [0] : vector<4x128xf32> to vector<128xf32>
      %9 = vector.shape_cast %8 : vector<128xf32> to vector<1x128xf32>
      %cst_4 = arith.constant 4.000000e+00 : f32
      %10 = vector.broadcast %cst_4 : f32 to vector<1x128xf32>
      %11 = arith.divf %9, %10 : vector<1x128xf32>
      %12 = arith.mulf %7, %7 : vector<4x128xf32>
      %cst_5 = arith.constant dense<0.000000e+00> : vector<128xf32>
      %13 = vector.multi_reduction <add>, %12, %cst_5 [0] : vector<4x128xf32> to vector<128xf32>
      %14 = vector.shape_cast %13 : vector<128xf32> to vector<1x128xf32>
      %cst_6 = arith.constant 4.000000e+00 : f32
      %15 = vector.broadcast %cst_6 : f32 to vector<1x128xf32>
      %16 = arith.divf %14, %15 : vector<1x128xf32>
      %17 = arith.mulf %11, %11 : vector<1x128xf32>
      %18 = arith.subf %16, %17 : vector<1x128xf32>
      %cst_7 = arith.constant 0.000000e+00 : f32
      %19 = vector.broadcast %cst_7 : f32 to vector<1x128xf32>
      %20 = arith.maximumf %18, %19 : vector<1x128xf32>
      %21 = vector.broadcast %11 : vector<1x128xf32> to vector<4x128xf32>
      %22 = arith.subf %7, %21 : vector<4x128xf32>
      %cst_8 = arith.constant 9.99999997E-7 : f32
      %23 = vector.broadcast %cst_8 : f32 to vector<1x128xf32>
      %24 = arith.addf %20, %23 : vector<1x128xf32>
      %25 = math.rsqrt %24 : vector<1x128xf32>
      %26 = vector.broadcast %25 : vector<1x128xf32> to vector<4x128xf32>
      %27 = arith.mulf %22, %26 : vector<4x128xf32>
      %c0_9 = arith.constant 0 : index
      %c0_10 = arith.constant 0 : index
      %28 = vector.load %arg4[%c0_9, %c0_10] : memref<4x1xf32, #tpu.memory_space<vmem>>, vector<4x1xf32>
      %29 = vector.broadcast %28 : vector<4x1xf32> to vector<4x128xf32>
      %30 = arith.mulf %29, %27 : vector<4x128xf32>
      %c0_11 = arith.constant 0 : index
      %c0_12 = arith.constant 0 : index
      %31 = vector.load %arg5[%c0_11, %c0_12] : memref<4x1xf32, #tpu.memory_space<vmem>>, vector<4x1xf32>
      %32 = vector.broadcast %31 : vector<4x1xf32> to vector<4x128xf32>
      %33 = arith.addf %30, %32 : vector<4x128xf32>
      %c0_i32_13 = arith.constant 0 : i32
      %34 = arith.cmpi eq, %arg2, %c0_i32_13 : i32
      %35 = arith.extui %34 : i1 to i32
      %c0_i32_14 = arith.constant 0 : i32
      %36 = arith.cmpi ne, %35, %c0_i32_14 : i32
      scf.if %36 {
        %cst_21 = arith.constant 0.000000e+00 : f32
        %45 = vector.broadcast %cst_21 : f32 to vector<4x4xf32>
        %c0_22 = arith.constant 0 : index
        %c0_23 = arith.constant 0 : index
        %46 = vector.load %arg8[%c0_22, %c0_23] : memref<4x4xf32, #tpu.memory_space<vmem>>, vector<4x4xf32>
        tpu.vector_store %arg8[%c0_22, %c0_23], %45 {strides = array<i32>} : memref<4x4xf32, #tpu.memory_space<vmem>>, vector<4x4xf32>,
      } else {
      }
      %c128_i32 = arith.constant 128 : i32
      %37 = arith.muli %arg2, %c128_i32 : i32
      %38 = tpu.assume_multiple %37, 128 : i32
      %c0_15 = arith.constant 0 : index
      %39 = arith.index_cast %38 : i32 to index
      %40 = vector.load %arg10[%c0_15, %39] : memref<4x256xf32, #tpu.memory_space<vmem>>, vector<4x128xf32>
      tpu.vector_store %arg10[%c0_15, %39], %33 {strides = array<i32>} : memref<4x256xf32, #tpu.memory_space<vmem>>, vector<4x128xf32>,
      %c0_16 = arith.constant 0 : index
      %c0_17 = arith.constant 0 : index
      %41 = vector.load %arg8[%c0_16, %c0_17] : memref<4x4xf32, #tpu.memory_space<vmem>>, vector<4x4xf32>
      %cst_18 = arith.constant dense<0.000000e+00> : vector<4x4xf32>
      %42 = tpu.matmul %33, %33, %cst_18 {dimension_numbers = #tpu.dot_dimension_numbers<[1], [1], [0], [0], [0, 0, 1, 0], [], []>} : vector<4x128xf32>, vector<4x128xf32>, vector<4x4xf32> -> vector<4x4xf32>
      %43 = arith.addf %41, %42 : vector<4x4xf32>
      %c0_19 = arith.constant 0 : index
      %c0_20 = arith.constant 0 : index
      %44 = vector.load %arg8[%c0_19, %c0_20] : memref<4x4xf32, #tpu.memory_space<vmem>>, vector<4x4xf32>
      tpu.vector_store %arg8[%c0_19, %c0_20], %43 {strides = array<i32>} : memref<4x4xf32, #tpu.memory_space<vmem>>, vector<4x4xf32>,
    } else {
    }
    %c1_i32 = arith.constant 1 : i32
    %3 = arith.cmpi eq, %arg1, %c1_i32 : i32
    %4 = arith.extui %3 : i1 to i32
    %c0_i32_1 = arith.constant 0 : i32
    %5 = arith.cmpi ne, %4, %c0_i32_1 : i32
    scf.if %5 {
      %c0_i32_2 = arith.constant 0 : i32
      %6 = arith.cmpi eq, %arg2, %c0_i32_2 : i32
      %7 = arith.extui %6 : i1 to i32
      %c0_i32_3 = arith.constant 0 : i32
      %8 = arith.cmpi ne, %7, %c0_i32_3 : i32
      scf.if %8 {
        %c0_9 = arith.constant 0 : index
        %c0_10 = arith.constant 0 : index
        %18 = vector.load %arg8[%c0_9, %c0_10] : memref<4x4xf32, #tpu.memory_space<vmem>>, vector<4x4xf32>
        %cst_11 = arith.constant dense<0x7F800000> : vector<4xf32>
        %19 = vector.multi_reduction <minimumf>, %18, %cst_11 [1] : vector<4x4xf32> to vector<4xf32>
        %20 = vector.shape_cast %19 : vector<4xf32> to vector<4x1xf32>
        %21 = vector.broadcast %20 : vector<4x1xf32> to vector<4x4xf32>
        %22 = arith.subf %21, %18 : vector<4x4xf32>
        %23 = math.exp %22 : vector<4x4xf32>
        %cst_12 = arith.constant dense<0.000000e+00> : vector<4xf32>
        %24 = vector.multi_reduction <add>, %23, %cst_12 [1] : vector<4x4xf32> to vector<4xf32>
        %25 = vector.shape_cast %24 : vector<4xf32> to vector<4x1xf32>
        %c0_13 = arith.constant 0 : index
        %26 = memref.load %arg6[%c0_13] : memref<1xf32, #tpu.memory_space<smem>>
        %27 = vector.broadcast %26 : f32 to vector<4x1xf32>
        %28 = arith.divf %27, %25 : vector<4x1xf32>
        %29 = vector.broadcast %28 : vector<4x1xf32> to vector<4x4xf32>
        %30 = arith.mulf %23, %29 : vector<4x4xf32>
        %c0_14 = arith.constant 0 : index
        %c0_15 = arith.constant 0 : index
        %31 = vector.load %arg9[%c0_14, %c0_15] : memref<4x4xf32, #tpu.memory_space<vmem>>, vector<4x4xf32>
        tpu.vector_store %arg9[%c0_14, %c0_15], %30 {strides = array<i32>} : memref<4x4xf32, #tpu.memory_space<vmem>>, vector<4x4xf32>,
      } else {
      }
      %c128_i32 = arith.constant 128 : i32
      %9 = arith.muli %arg2, %c128_i32 : i32
      %10 = tpu.assume_multiple %9, 128 : i32
      %c0 = arith.constant 0 : index
      %11 = arith.index_cast %10 : i32 to index
      %12 = vector.load %arg10[%c0, %11] : memref<4x256xf32, #tpu.memory_space<vmem>>, vector<4x128xf32>
      %c0_4 = arith.constant 0 : index
      %c0_5 = arith.constant 0 : index
      %13 = vector.load %arg9[%c0_4, %c0_5] : memref<4x4xf32, #tpu.memory_space<vmem>>, vector<4x4xf32>
      %cst = arith.constant dense<0.000000e+00> : vector<4x128xf32>
      %14 = tpu.matmul %13, %12, %cst {dimension_numbers = #tpu.dot_dimension_numbers<[1], [0], [0], [1], [0, 0, 1, 1], [], []>} : vector<4x4xf32>, vector<4x128xf32>, vector<4x128xf32> -> vector<4x128xf32>
      %c0_6 = arith.constant 0 : index
      %c0_7 = arith.constant 0 : index
      %c0_8 = arith.constant 0 : index
      %15 = vector.load %arg7[%c0_6, %c0_7, %c0_8] : memref<1x4x128xf32, #tpu.memory_space<vmem>>, vector<1x4x128xf32>
      %16 = vector.shape_cast %15 : vector<1x4x128xf32> to vector<4x128xf32>
      %17 = vector.shape_cast %14 : vector<4x128xf32> to vector<1x4x128xf32>
      tpu.vector_store %arg7[%c0_6, %c0_7, %c0_8], %17 {strides = array<i32>} : memref<1x4x128xf32, #tpu.memory_space<vmem>>, vector<1x4x128xf32>,
    } else {
    }
    return
  }
  func.func @transform_0(%arg0: i32, %arg1: i32, %arg2: i32) -> (i32, i32, i32) {
    %c1_i32 = arith.constant 1 : i32
    %0 = arith.subi %c1_i32, %arg1 : i32
    %1 = arith.muli %arg2, %0 : i32
    %c0_i32 = arith.constant 0 : i32
    %c0_i32_0 = arith.constant 0 : i32
    return %arg0, %c0_i32, %1 : i32, i32, i32
  }
  func.func @transform_1(%arg0: i32, %arg1: i32, %arg2: i32) -> (i32, i32) {
    %c0_i32 = arith.constant 0 : i32
    %c0_i32_0 = arith.constant 0 : i32
    %c0_i32_1 = arith.constant 0 : i32
    return %c0_i32, %c0_i32_0 : i32, i32
  }
  func.func @transform_2(%arg0: i32, %arg1: i32, %arg2: i32) -> (i32, i32) {
    %c0_i32 = arith.constant 0 : i32
    %c0_i32_0 = arith.constant 0 : i32
    %c0_i32_1 = arith.constant 0 : i32
    return %c0_i32, %c0_i32_0 : i32, i32
  }
  func.func @transform_3(%arg0: i32, %arg1: i32, %arg2: i32) -> i32 {
    %c0_i32 = arith.constant 0 : i32
    %c0_i32_0 = arith.constant 0 : i32
    return %c0_i32 : i32
  }
  func.func @transform_4(%arg0: i32, %arg1: i32, %arg2: i32) -> (i32, i32, i32) {
    %0 = arith.muli %arg2, %arg1 : i32
    %c0_i32 = arith.constant 0 : i32
    %c0_i32_0 = arith.constant 0 : i32
    return %arg0, %c0_i32, %0 : i32, i32, i32
  }
}

</mosaic_0001>

<llo_original>
// kernel: tpu_custom_call.1
$region0: #{tpu_custom_call.1}
  #allocation0 [shape = 'u32[]', space=smem, size = 0x4, offset = 0x4, fixed_abs, tag = 'smem constant byte address 0x4 - core index']
  #allocation1 [shape = 'u32[72,128]{1,0:T(1,128)}', space=vmem, size = 0x9000, scoped, tag = 'internal scratch']
  #allocation2 [shape = 'f32[4,4]{1,0:T(4,128)}', space=vmem, size = 0x800, scoped, tag = 'scratch operand']
  #allocation3 [shape = 'f32[4,4]{1,0:T(4,128)}', space=vmem, size = 0x800, scoped, tag = 'scratch operand']
  #allocation4 [shape = 'f32[4,256]{1,0:T(4,128)}', space=vmem, size = 0x1000, scoped, tag = 'scratch operand']
  #allocation5 [shape = 'f32[1]{0:T(128)S(6)}', space=smem, size = 0x200, scoped, tag = 'scoped memory for tpu_custom_call.1']
  %s0 = inlined_call_operand.hbm [shape: f32[2,4,256], index: 0, kind: input, shape index: {}]
  %s1 = inlined_call_operand.vmem [shape: f32[4,1], index: 1, kind: input, shape index: {}]
  %s2 = inlined_call_operand.vmem [shape: f32[4,1], index: 2, kind: input, shape index: {}]
  %s3 = inlined_call_operand.<no memory space> [shape: f32[1], index: 3, kind: input, shape index: {}]
  %s4 = inlined_call_operand.hbm [shape: f32[2,4,256], index: 4, kind: output, shape index: {}]
  %s5 = sld [smem:[#allocation0]]
  $region69: #{tpu_custom_call.1} parent=0
    _
  %s7 = ssub.s32 1, %s5
  %s8 = scalar_select 0, %s7, %s5
  %9 = sst [smem:[#allocation5]] %s3
  $region1: #{tpu_custom_call.1} parent=0
    #allocation6 [shape = 'u8[4096]{0}', space=vmem, size = 0x1000, scoped, tag = 'input window, operand 0']
    #allocation7 [shape = 's32[2]{0}', space=sflag, size = 0x8, scoped, tag = 'scoped memory for tpu_custom_call.1']
    #allocation8 [shape = 's32[2]{0}', space=sflag, size = 0x8, scoped, tag = 'scoped memory for tpu_custom_call.1']
    #allocation9 [shape = 'u8[4096]{0}', space=vmem, size = 0x1000, scoped, tag = 'output window, operand 0']
    %10 = vsyncpa [#allocation7], 0
    %s11 = scalar_lea.sflag [#allocation7], 1
    %12 = vsyncpa %s11, 0
    %13 = vsyncpa [#allocation8], 0
    %s14 = scalar_lea.sflag [#allocation8], 1
    %15 = vsyncpa %s14, 0
    loop: start=0, step=1, limit=10
    $region2: #{tpu_custom_call.1} parent=1 // loop_pre_header
      _
    $region3: #{tpu_custom_call.1} parent=1 // loop_header
      %s17 = sphi 0, %s21
      %p18 = scmp.ge.s32.totalorder %s17, 10
      %s24 = sphi 0, %s43
      %s25 = sphi 0, %s39
      %s26 = sphi 0, %s35
      %s27 = sphi 0, %s24
      %s28 = sphi 0, %s25
      %s29 = sphi 0, %s26
      %s30 = sphi 0, %s27
      %s31 = sphi 0, %s28
      %s32 = sphi 0, %s29
      %s52 = sphi 0, %s54
      %s55 = sphi 0, %s52
      %s56 = sphi 0, %s55
      %s72 = sphi 0, %s56
      %s76 = sphi 0, %s76
      %s78 = sphi 0, %s76
      %s79 = sphi 0, %s78
      %s93 = sphi 0, %s79
      %s97 = sphi 0, %s97
      %s99 = sphi 0, %s97
      %s100 = sphi 0, %s99
      %s114 = sphi 0, %s100
      %s118 = sphi 0, %s118
      %s120 = sphi 0, %s118
      %s121 = sphi 0, %s120
      %s135 = sphi 0, %s121
      %s145 = sphi 0, %s147
      %s148 = sphi 0, %s145
      %s149 = sphi 0, %s148
      %s165 = sphi 0, %s149
    $region4: #{tpu_custom_call.1} parent=1 // loop_header_branch
      %20 = sbr.rel (%p18) target = $region8
    $region5: #{tpu_custom_call.1} parent=1 // loop_body
      %s22 = ssub.s32 %s17, 1
      %s23 = ssub.s32 %s17, 2
      %s33 = sadd.s32 1, %s26
      %p34 = scmp.ge.s32.totalorder %s33, 2
      %s35 = scalar_select %p34, 0, %s33
      %s36 = sadd.s32 1, %s25
      %s37 = scalar_select %p34, %s36, %s25
      %p38 = scmp.ge.s32.totalorder %s37, 2
      %s39 = scalar_select %p38, 0, %s37
      %s40 = sadd.s32 1, %s24
      %s41 = scalar_select %p38, %s40, %s24
      %p42 = scmp.ge.s32.totalorder %s41, 2
      %s43 = scalar_select %p42, 0, %s41
      %s44 = ssub.s32 1, %s25
      %s45 = smul.u32 %s26, %s44
      %s46 = ssub.s32 1, %s39
      %s47 = smul.u32 %s35, %s46
      %s48 = ssub.s32 %s24, %s43
      %s49 = ssub.s32 %s45, %s47
      %s50 = sor.u32 %s48, %s49
      %p51 = scmp.eq.s32.totalorder %s50, 0
      %s53 = sadd.s32 %s52, 1
      %s54 = scalar_select %p51, %s52, %s53
      %p57 = pneg %p51
      %p58 = scmp.eq.s32.totalorder %s17, 7
      %p59 = por %p57, %p58
      %p60 = scmp.ne.s32.totalorder %s52, %s55
      %p61 = scmp.eq.s32.totalorder %s17, 0
      %p62 = por %p60, %p61
      %p63 = scmp.ne.s32.totalorder %s52, %s55
      %p64 = scmp.eq.s32.totalorder %s22, 7
      %p65 = por %p63, %p64
      %p66 = scmp.ne.s32.totalorder %s55, %s56
      %p67 = scmp.eq.s32.totalorder %s22, 0
      %p68 = por %p66, %p67
      %p69 = scmp.ne.s32.totalorder %s55, %s56
      %p70 = scmp.eq.s32.totalorder %s23, 7
      %p71 = por %p69, %p70
      %p73 = scmp.ne.s32.totalorder %s56, %s72
      %p74 = scmp.eq.s32.totalorder %s23, 0
      %p75 = por %p73, %p74
      %s77 = sadd.s32 %s76, 1
      %p80 = scmp.eq.s32.totalorder %s17, 7
      %p81 = scmp.ne.s32.totalorder %s76, %s78
      %p82 = scmp.eq.s32.totalorder %s17, 0
      %p83 = por %p81, %p82
      %p84 = scmp.ne.s32.totalorder %s76, %s78
      %p85 = scmp.eq.s32.totalorder %s22, 7
      %p86 = por %p84, %p85
      %p87 = scmp.ne.s32.totalorder %s78, %s79
      %p88 = scmp.eq.s32.totalorder %s22, 0
      %p89 = por %p87, %p88
      %p90 = scmp.ne.s32.totalorder %s78, %s79
      %p91 = scmp.eq.s32.totalorder %s23, 7
      %p92 = por %p90, %p91
      %p94 = scmp.ne.s32.totalorder %s79, %s93
      %p95 = scmp.eq.s32.totalorder %s23, 0
      %p96 = por %p94, %p95
      %s98 = sadd.s32 %s97, 1
      %p101 = scmp.eq.s32.totalorder %s17, 7
      %p102 = scmp.ne.s32.totalorder %s97, %s99
      %p103 = scmp.eq.s32.totalorder %s17, 0
      %p104 = por %p102, %p103
      %p105 = scmp.ne.s32.totalorder %s97, %s99
      %p106 = scmp.eq.s32.totalorder %s22, 7
      %p107 = por %p105, %p106
      %p108 = scmp.ne.s32.totalorder %s99, %s100
      %p109 = scmp.eq.s32.totalorder %s22, 0
      %p110 = por %p108, %p109
      %p111 = scmp.ne.s32.totalorder %s99, %s100
      %p112 = scmp.eq.s32.totalorder %s23, 7
      %p113 = por %p111, %p112
      %p115 = scmp.ne.s32.totalorder %s100, %s114
      %p116 = scmp.eq.s32.totalorder %s23, 0
      %p117 = por %p115, %p116
      %s119 = sadd.s32 %s118, 1
      %p122 = scmp.eq.s32.totalorder %s17, 7
      %p123 = scmp.ne.s32.totalorder %s118, %s120
      %p124 = scmp.eq.s32.totalorder %s17, 0
      %p125 = por %p123, %p124
      %p126 = scmp.ne.s32.totalorder %s118, %s120
      %p127 = scmp.eq.s32.totalorder %s22, 7
      %p128 = por %p126, %p127
      %p129 = scmp.ne.s32.totalorder %s120, %s121
      %p130 = scmp.eq.s32.totalorder %s22, 0
      %p131 = por %p129, %p130
      %p132 = scmp.ne.s32.totalorder %s120, %s121
      %p133 = scmp.eq.s32.totalorder %s23, 7
      %p134 = por %p132, %p133
      %p136 = scmp.ne.s32.totalorder %s121, %s135
      %p137 = scmp.eq.s32.totalorder %s23, 0
      %p138 = por %p136, %p137
      %s139 = smul.u32 %s26, %s25
      %s140 = smul.u32 %s35, %s39
      %s141 = ssub.s32 %s24, %s43
      %s142 = ssub.s32 %s139, %s140
      %s143 = sor.u32 %s141, %s142
      %p144 = scmp.eq.s32.totalorder %s143, 0
      %s146 = sadd.s32 %s145, 1
      %s147 = scalar_select %p144, %s145, %s146
      %p150 = pneg %p144
      %p151 = scmp.eq.s32.totalorder %s17, 7
      %p152 = por %p150, %p151
      %p153 = scmp.ne.s32.totalorder %s145, %s148
      %p154 = scmp.eq.s32.totalorder %s17, 0
      %p155 = por %p153, %p154
      %p156 = scmp.ne.s32.totalorder %s145, %s148
      %p157 = scmp.eq.s32.totalorder %s22, 7
      %p158 = por %p156, %p157
      %p159 = scmp.ne.s32.totalorder %s148, %s149
      %p160 = scmp.eq.s32.totalorder %s22, 0
      %p161 = por %p159, %p160
      %p162 = scmp.ne.s32.totalorder %s148, %s149
      %p163 = scmp.eq.s32.totalorder %s23, 7
      %p164 = por %p162, %p163
      %p166 = scmp.ne.s32.totalorder %s149, %s165
      %p167 = scmp.eq.s32.totalorder %s23, 0
      %p168 = por %p166, %p167
      %p169 = scmp.le.s32.totalorder 1, %s17
      %p170 = scmp.lt.s32.totalorder %s17, 9
      %p171 = pnand %p169, %p170
      %p172 = pneg %p171
      // Predicated region
      $region9: #{tpu_custom_call.1} parent=5 // pred_check
        _
      $region10: #{tpu_custom_call.1} parent=5 // pred_check_branch
        %174 = sbr.rel (%p171) target = $region12
      $region11: #{tpu_custom_call.1} parent=5 // pred_region
        %s175 = ssub.s32 %s17, 1
        // Predicated region
        $region13: #{tpu_custom_call.1} parent=11 // pred_check
          %p176 = pneg %p89
        $region14: #{tpu_custom_call.1} parent=11 // pred_check_branch
          %178 = sbr.rel (%p176) target = $region16
        $region15: #{tpu_custom_call.1} parent=11 // pred_region
          _
        $region16: #{tpu_custom_call.1} parent=11 // pred_fallthru
          _
        // Predicated region
        $region17: #{tpu_custom_call.1} parent=11 // pred_check
          %p179 = pneg %p110
        $region18: #{tpu_custom_call.1} parent=11 // pred_check_branch
          %181 = sbr.rel (%p179) target = $region20
        $region19: #{tpu_custom_call.1} parent=11 // pred_region
          _
        $region20: #{tpu_custom_call.1} parent=11 // pred_fallthru
          _
        // Predicated region
        $region21: #{tpu_custom_call.1} parent=11 // pred_check
          %p182 = pneg %p131
        $region22: #{tpu_custom_call.1} parent=11 // pred_check_branch
          %184 = sbr.rel (%p182) target = $region24
        $region23: #{tpu_custom_call.1} parent=11 // pred_region
          _
        $region24: #{tpu_custom_call.1} parent=11 // pred_fallthru
          _
      $region12: #{tpu_custom_call.1} parent=5 // pred_fallthru
        _
      %p185 = scmp.lt.s32.totalorder %s17, 8
      // Predicated region
      $region25: #{tpu_custom_call.1} parent=5 // pred_check
        %p186 = pneg %p185
      $region26: #{tpu_custom_call.1} parent=5 // pred_check_branch
        %188 = sbr.rel (%p186) target = $region28
      $region27: #{tpu_custom_call.1} parent=5 // pred_region
        // Predicated region
        $region29: #{tpu_custom_call.1} parent=27 // pred_check
          %p189 = pneg %p62
        $region30: #{tpu_custom_call.1} parent=27 // pred_check_branch
          %191 = sbr.rel (%p189) target = $region32
        $region31: #{tpu_custom_call.1} parent=27 // pred_region
          %s192 = sand.u32 %s52, 1
          %s193 = scalar_lea.sflag [#allocation7], %s192
          %s194 = sand.u32 %s52, 1
          %s195 = smul.addr %s194, 4
          %s196 = scalar_lea.vmem [#allocation6], %s195
          %s197 = ssub.s32 1, %s25
          %s198 = smul.u32 %s26, %s197
          %200 = vsyncadd %s193, 0
          %s201 = smul.addr %s24, 2
          %s202 = sadd.s32 %s198, %s201
          %s203 = smul.addr %s202, 4
          %s204 = scalar_lea.hbm %s0, %s203
          %s206 = sshll.u32 %s204, 4
          %s207 = int_to_ptr.hbm [resolvable:$true] %s206
          %s208 = sshll.u32 %s196, 4
          %s209 = int_to_ptr.vmem [resolvable:$true] %s208
          %211 = dma.hbm_to_vmem [thread:$0]  %s207, 64, %s209, %s193
        $region32: #{tpu_custom_call.1} parent=27 // pred_fallthru
          _
      $region28: #{tpu_custom_call.1} parent=5 // pred_fallthru
        _
      %p212 = scmp.le.s32.totalorder 1, %s17
      %p213 = scmp.lt.s32.totalorder %s17, 9
      %p214 = pnand %p212, %p213
      %p215 = pneg %p214
      // Predicated region
      $region33: #{tpu_custom_call.1} parent=5 // pred_check
        _
      $region34: #{tpu_custom_call.1} parent=5 // pred_check_branch
        %217 = sbr.rel (%p214) target = $region36
      $region35: #{tpu_custom_call.1} parent=5 // pred_region
        %s218 = ssub.s32 %s17, 1
        %s219 = sand.u32 %s55, 1
        %s220 = scalar_lea.sflag [#allocation7], %s219
        %s221 = sand.u32 %s55, 1
        %s222 = smul.addr %s221, 4
        %s223 = scalar_lea.vmem [#allocation6], %s222
        // Predicated region
        $region37: #{tpu_custom_call.1} parent=35 // pred_check
          %p224 = pneg %p68
        $region38: #{tpu_custom_call.1} parent=35 // pred_check_branch
          %226 = sbr.rel (%p224) target = $region40
        $region39: #{tpu_custom_call.1} parent=35 // pred_region
          %228 = dma.done %s220, 64
        $region40: #{tpu_custom_call.1} parent=35 // pred_fallthru
          _
        %s229 = sand.u32 %s55, 1
        %s230 = scalar_lea.sflag [#allocation7], %s229
        %s231 = sand.u32 %s55, 1
        %s232 = smul.addr %s231, 4
        %s233 = scalar_lea.vmem [#allocation6], %s232
        %p234 = pneg %p68
        %p235 = pneg %p65
        %p236 = pneg %p89
        %p237 = pneg %p86
        %p238 = pneg %p110
        %p239 = pneg %p107
        %p240 = pneg %p131
        %p241 = pneg %p128
        %p242 = pneg %p161
        %p243 = pneg %p158
        %s244 = sand.u32 %s148, 1
        %s245 = scalar_lea.sflag [#allocation8], %s244
        %s246 = sand.u32 %s148, 1
        %s247 = smul.addr %s246, 4
        %s248 = scalar_lea.vmem [#allocation9], %s247
        %s249 = ssub.s32 1, %s28
        %s250 = smul.u32 %s29, %s249
        %s251 = smul.u32 %s29, %s28
        %p252 = scmp.eq.s32.totalorder %s28, 0
        // Predicated region
        $region41: #{tpu_custom_call.1} parent=35 // pred_check
          %p253 = pneg %p252
        $region42: #{tpu_custom_call.1} parent=35 // pred_check_branch
          %255 = sbr.rel (%p253) target = $region44
        $region43: #{tpu_custom_call.1} parent=35 // pred_region
          %v256 = vld [vmem:[%s223] sm:$0xf]
          %vm257 = vcmask 1043456
          %v258 = vsel %vm257, %v256, 0.0
          %v259 = vrot.slane %v258, 4
          %v260 = vadd.f32 %v258, %v259
          %v261 = vrot.slane %v260, 2
          %v262 = vadd.f32 %v260, %v261
          %v263 = vrot.slane %v262, 1
          %v264 = vadd.f32 %v262, %v263
          %v265 = vrcp.pop 4.0
          %v266 = vmul.f32 4.0, %v265
          %v267 = vsub.f32 1.0, %v266
          %v268 = vmul.f32 %v265, %v267
          %v269 = vadd.f32 %v265, %v268
          %vm270 = vweird.f32 %v265
          %v271 = vsel %vm270, %v265, %v269
          %v272 = vmul.f32 %v264, %v271
          %v273 = vmul.f32 %v256, %v256
          %v274 = vsel %vm257, %v273, 0.0
          %v275 = vrot.slane %v274, 4
          %v276 = vadd.f32 %v274, %v275
          %v277 = vrot.slane %v276, 2
          %v278 = vadd.f32 %v276, %v277
          %v279 = vrot.slane %v278, 1
          %v280 = vadd.f32 %v278, %v279
          %v281 = vmul.f32 %v280, %v271
          %v282 = vmul.f32 %v272, %v272
          %v283 = vsub.f32 %v281, %v282
          %v284 = vmax.f32 %v283, 0.0
          %v285 = vsub.f32 %v256, %v272
          %v286 = vadd.f32 %v284, 1e-06
          %v287 = vrsqrt.pop %v286
          %v288 = vmul.f32 %v287, %v286
          %v289 = vmul.f32 %v288, %v287
          %v290 = vmul.f32 0.5, %v289
          %v291 = vsub.f32 1.5, %v290
          %v292 = vmul.f32 %v287, %v291
          %vm293 = vweird.f32 %v286
          %vm294 = vweird.f32 %v287
          %vm295 = vmor %vm293, %vm294
          %v296 = vsel %vm295, %v287, %v292
          %v297 = vmul.f32 %v285, %v296
          %v298 = vld [vmem:[%s1] sm:$0xf]
          %300 = vset.pattern.permute.xlu0 0
          %301 = vperm.xlu0 %300, %v298
          %v302 = vpop.permute.xlu0 %301
          %v304 = vmul.f32 %v302, %v297
          %v305 = vld [vmem:[%s2] sm:$0xf]
          %307 = vset.pattern.permute.xlu0 0
          %308 = vperm.xlu0 %307, %v305
          %v309 = vpop.permute.xlu0 %308
          %v311 = vadd.f32 %v304, %v309
          %p312 = scmp.eq.s32.totalorder %s29, 0
          // Predicated region
          $region45: #{tpu_custom_call.1} parent=43 // pred_check
            %p313 = pneg %p312
          $region46: #{tpu_custom_call.1} parent=43 // pred_check_branch
            %315 = sbr.rel (%p313) target = $region48
          $region47: #{tpu_custom_call.1} parent=43 // pred_region
            %vm316 = vcmask 27648
            %317 = vst.msk [vmem:[#allocation2] sm:$0xf] %vm316, 0.0
          $region48: #{tpu_custom_call.1} parent=43 // pred_fallthru
            _
          %s318 = smul.u32 %s29, 128
          %s319 = sshra.s32 %s318, 7
          %s320 = sand.u32 %s318, 127
          %s321 = smul.addr %s319, 4
          %s322 = scalar_lea.vmem [#allocation4], %s321
          %323 = vst [vmem:[%s322] sm:$0xf] %v311
          %v324 = vld [vmem:[#allocation2] sm:$0xf]
          %325 = vmatpush.xpose.msra.mxu0 0.0
          %326 = vmatpush.xpose.msra.mxu0 0.0
          %327 = vmatpush.xpose.msra.mxu0 0.0
          %328 = vmatpush.xpose.msra.mxu0 0.0
          %329 = vmatpush.xpose.msra.mxu0 0.0
          %330 = vmatpush.xpose.msra.mxu0 0.0
          %331 = vmatpush.xpose.msra.mxu0 0.0
          %332 = vmatpush.xpose.msra.mxu0 0.0
          %333 = vmatpush.xpose.msra.mxu0 0.0
          %334 = vmatpush.xpose.msra.mxu0 0.0
          %335 = vmatpush.xpose.msra.mxu0 0.0
          %336 = vmatpush.xpose.msra.mxu0 0.0
          %337 = vmatpush.xpose.msra.mxu0 0.0
          %338 = vmatpush.xpose.msra.mxu0 0.0
          %339 = vmatpush.xpose.msra.mxu0 0.0
          %340 = vmatpush.xpose.msra.mxu0 %v311
          %341 = vmatmul.f32.gmra.mxu0 %v311
          %v342 = vpop.f32.mrf.mxu0
          %v343 = vadd.f32 0.0, %v342
          %344 = vdwg.mxu0
          %v345 = vadd.f32 %v324, %v343
          %vm346 = vcmask 27648
          %347 = vst.msk [vmem:[#allocation2] sm:$0xf] %vm346, %v345
        $region44: #{tpu_custom_call.1} parent=35 // pred_fallthru
          _
        %p348 = scmp.eq.s32.totalorder %s28, 1
        // Predicated region
        $region49: #{tpu_custom_call.1} parent=35 // pred_check
          %p349 = pneg %p348
        $region50: #{tpu_custom_call.1} parent=35 // pred_check_branch
          %351 = sbr.rel (%p349) target = $region52
        $region51: #{tpu_custom_call.1} parent=35 // pred_region
          %p352 = scmp.eq.s32.totalorder %s29, 0
          // Predicated region
          $region53: #{tpu_custom_call.1} parent=51 // pred_check
            %p353 = pneg %p352
          $region54: #{tpu_custom_call.1} parent=51 // pred_check_branch
            %355 = sbr.rel (%p353) target = $region56
          $region55: #{tpu_custom_call.1} parent=51 // pred_region
            %v356 = vld [vmem:[#allocation2] sm:$0xf]
            %vm357 = vcmask 27648
            %v358 = vsel %vm357, %v356, inf
            %359 = vmin.xlane.f32.xlu0 %v358
            %v360 = vpop.xlane.xlu0 %359
            %v361 = vsub.f32 %v360, %v356
            %v362 = vmul.f32 %v361, 1.442695
            %v363 = vpow.pop %v362
            %v364 = vsel %vm357, %v363, 0.0
            %365 = vadd.xlane.f32.xlu0 %v364
            %v366 = vpop.xlane.xlu0 %365
            %s367 = sld [smem:[#allocation5]]
            %v368 = vstv %s367
            %v369 = vrcp.pop %v366
            %v370 = vmul.f32 %v366, %v369
            %v371 = vsub.f32 1.0, %v370
            %v372 = vmul.f32 %v369, %v371
            %v373 = vadd.f32 %v369, %v372
            %vm374 = vweird.f32 %v366
            %vm375 = vweird.f32 %v369
            %vm376 = vmor %vm374, %vm375
            %v377 = vsel %vm376, %v369, %v373
            %v378 = vand.u32 2147483647, %v366
            %vm379 = vcmp.eq.f32.partialorder %v378, 8.507059e+37
            %v380 = vand.u32 %v366, 2147483648
            %v381 = vor.u32 1.1754944e-38, %v380
            %v382 = vsel %vm379, %v381, %v377
            %v383 = vmul.f32 %v368, %v382
            %v384 = vmul.f32 %v363, %v383
            %385 = vst.msk [vmem:[#allocation3] sm:$0xf] %vm357, %v384
          $region56: #{tpu_custom_call.1} parent=51 // pred_fallthru
            _
          %s386 = smul.u32 %s29, 128
          %s387 = sshra.s32 %s386, 7
          %s388 = sand.u32 %s386, 127
          %s389 = smul.addr %s387, 4
          %s390 = scalar_lea.vmem [#allocation4], %s389
          %v391 = vld [vmem:[%s390] sm:$0xf]
          %v392 = vld [vmem:[#allocation3] sm:$0xf]
          %vm393 = vcmask 31744
          %v395 = vsel %vm393, %v392, 0
          %vm397 = vcmask 1043456
          %v399 = vsel %vm397, %v391, 0
          %401 = vmatpush.msra.mxu0 0.0
          %402 = vmatpush.msra.mxu0 0.0
          %403 = vmatpush.msra.mxu0 0.0
          %404 = vmatpush.msra.mxu0 0.0
          %405 = vmatpush.msra.mxu0 0.0
          %406 = vmatpush.msra.mxu0 0.0
          %407 = vmatpush.msra.mxu0 0.0
          %408 = vmatpush.msra.mxu0 0.0
          %409 = vmatpush.msra.mxu0 0.0
          %410 = vmatpush.msra.mxu0 0.0
          %411 = vmatpush.msra.mxu0 0.0
          %412 = vmatpush.msra.mxu0 0.0
          %413 = vmatpush.msra.mxu0 0.0
          %414 = vmatpush.msra.mxu0 0.0
          %415 = vmatpush.msra.mxu0 0.0
          %416 = vmatpush.msra.mxu0 %v399
          %417 = vmatmul.f32.gmra.mxu0 %v395
          %v418 = vpop.f32.mrf.mxu0
          %v419 = vadd.f32 0.0, %v418
          %420 = vdwg.mxu0
          %421 = vst [vmem:[%s248] sm:$0xf] %v419
        $region52: #{tpu_custom_call.1} parent=35 // pred_fallthru
          _
        %s422 = sand.u32 %s148, 1
        %s423 = scalar_lea.sflag [#allocation8], %s422
        %s424 = sand.u32 %s148, 1
        %s425 = smul.addr %s424, 4
        %s426 = scalar_lea.vmem [#allocation9], %s425
        // Predicated region
        $region57: #{tpu_custom_call.1} parent=35 // pred_check
          %p427 = pneg %p158
        $region58: #{tpu_custom_call.1} parent=35 // pred_check_branch
          %429 = sbr.rel (%p427) target = $region60
        $region59: #{tpu_custom_call.1} parent=35 // pred_region
          %s430 = smul.u32 %s29, %s28
          %432 = vsyncadd %s423, 0
          %s433 = smul.addr %s27, 2
          %s434 = sadd.s32 %s430, %s433
          %s435 = smul.addr %s434, 4
          %s436 = scalar_lea.hbm %s4, %s435
          %s438 = sshll.u32 %s426, 4
          %s439 = int_to_ptr.vmem [resolvable:$true] %s438
          %s440 = sshll.u32 %s436, 4
          %s441 = int_to_ptr.hbm [resolvable:$true] %s440
          %443 = dma.vmem_to_hbm [thread:$0]  %s439, 64, %s441, %s423
        $region60: #{tpu_custom_call.1} parent=35 // pred_fallthru
          _
      $region36: #{tpu_custom_call.1} parent=5 // pred_fallthru
        _
      %p444 = scmp.le.s32.totalorder 2, %s17
      // Predicated region
      $region61: #{tpu_custom_call.1} parent=5 // pred_check
        %p445 = pneg %p444
      $region62: #{tpu_custom_call.1} parent=5 // pred_check_branch
        %447 = sbr.rel (%p445) target = $region64
      $region63: #{tpu_custom_call.1} parent=5 // pred_region
        %s448 = ssub.s32 %s17, 2
        // Predicated region
        $region65: #{tpu_custom_call.1} parent=63 // pred_check
          %p449 = pneg %p164
        $region66: #{tpu_custom_call.1} parent=63 // pred_check_branch
          %451 = sbr.rel (%p449) target = $region68
        $region67: #{tpu_custom_call.1} parent=63 // pred_region
          %s452 = sand.u32 %s149, 1
          %s453 = scalar_lea.sflag [#allocation8], %s452
          %s454 = sand.u32 %s149, 1
          %s455 = smul.addr %s454, 4
          %s456 = scalar_lea.vmem [#allocation9], %s455
          %458 = dma.done %s453, 64
        $region68: #{tpu_custom_call.1} parent=63 // pred_fallthru
          _
      $region64: #{tpu_custom_call.1} parent=5 // pred_fallthru
        _
    $region6: #{tpu_custom_call.1} parent=1 // loop_footer
      %s21 = sadd.s32 1, %s17
    $region7: #{tpu_custom_call.1} parent=1 // loop_footer_branch
      %16 = sbr.rel target = $region3
    $region8: #{tpu_custom_call.1} parent=1 // loop_exit
      _
    %459 = vsyncpa [#allocation7], 1
    %s460 = scalar_lea.sflag [#allocation7], 1
    %461 = vsyncpa %s460, 1
    %462 = vsyncpa [#allocation8], 1
    %s463 = scalar_lea.sflag [#allocation8], 1
    %464 = vsyncpa %s463, 1

</llo_original>
